<compile_context>
chip_gen: v7x
topology: tpu7x:2x2x1
jax: 0.10.0
libtpu: 0.0.40
codegen_flags: <defaults>
</compile_context>

<pallas_src>
import functools

import jax
import jax.numpy as jnp
from jax.experimental import pallas as pl
from jax.experimental.pallas import tpu as pltpu


def _round_up(x, m):
    return ((x + m - 1) // m) * m


def _vmem_capacity_bytes():
    """Per-core VMEM capacity; falls back to the v7x-safe lower bound."""
    try:
        return int(pltpu.get_tpu_info().vmem_capacity_bytes)
    except Exception:
        return 64 * 1024 * 1024


def _choose_tiles(m, k_pad, n_pad, x_itemsize, w_itemsize):
    """Pick (tm, tn, vmem_limit_bytes) against the per-generation VMEM budget."""
    cap = _vmem_capacity_bytes()
    budget = int(cap * 0.70)          # headroom for compiler scratch / bookkeeping
    vmem_limit = int(cap * 0.90)

    sub = 8 if x_itemsize >= 4 else 16        # sublane floor for the activation dtype
    m_pad = _round_up(m, sub)

    # N panel: largest multiple of 128 whose single-buffered resident weight
    # panel (+ bias) leaves at least half the budget for the streaming tiles.
    tn = n_pad
    while tn > 128 and (k_pad * tn * w_itemsize + tn * 4) > budget // 2:
        tn = _round_up(tn // 2, 128)
    resident = k_pad * tn * w_itemsize + tn * 4
    # TODO(synk): add K-tiling (f32 VMEM accumulator + pl.when init/finalize)
    # if a single (k_pad, 128) weight panel ever exceeds the VMEM budget.

    # M tile: largest power-of-two <= 512 whose double-buffered x/out streams
    # fit the remaining budget (out dtype == x dtype).
    tm = 512
    while tm > sub:
        stream = 2 * tm * k_pad * x_itemsize + 2 * tm * tn * x_itemsize
        if resident + stream <= budget:
            break
        tm //= 2
    tm = max(tm, sub)
    tm = min(tm, m_pad)

    # Megacore (v7x has 2 TensorCores): keep >= 2 grid steps whenever possible.
    if tn == n_pad and m_pad >= 2 * sub:
        tm = min(tm, _round_up(pl.cdiv(m_pad, 2), sub))

    return tm, tn, vmem_limit


def _linear_kernel(x_ref, wT_ref, b_ref, o_ref):
    # x_ref: (TM, K) activation tile (original dtype)
    # wT_ref: (K, TN) resident weight panel (bf16 or f32)
    # b_ref: (1, TN) f32 bias panel
    # o_ref: (TM, TN)
    w = wT_ref[...]
    x = x_ref[...].astype(w.dtype)  # in-kernel bf16 cast; no-op for the f32 path
    acc = jnp.dot(x, w, preferred_element_type=jnp.float32)
    o_ref[...] = (acc + b_ref[...]).astype(o_ref.dtype)


@functools.partial(
    jax.jit,
    static_argnames=("tm", "tn", "k_pad", "n_pad", "out_dim", "vmem_limit"))
def _linear_fwd(x2d, wT_pad, b_pad, *, tm, tn, k_pad, n_pad, out_dim, vmem_limit):
    m, k = x2d.shape
    sub = 8 if x2d.dtype.itemsize >= 4 else 16
    m_pad = _round_up(m, sub)

    # Pad only when actually needed (avoids a full HBM round trip otherwise).
    if m_pad != m or k_pad != k:
        x2d = jnp.pad(x2d, ((0, m_pad - m), (0, k_pad - k)))

    gi = pl.cdiv(m_pad, tm)   # M tiles (inner, fast axis)
    gj = pl.cdiv(n_pad, tn)   # N panels (outer)

    flops = 2 * m_pad * k_pad * n_pad
    bytes_accessed = (
        m_pad * k_pad * x2d.dtype.itemsize * gj        # x streamed once per panel
        + k_pad * n_pad * wT_pad.dtype.itemsize        # each weight panel fetched once
        + n_pad * 4                                    # bias
        + m_pad * n_pad * x2d.dtype.itemsize           # output writeback
    )

    out = pl.pallas_call(
        _linear_kernel,
        out_shape=jax.ShapeDtypeStruct((m_pad, n_pad), x2d.dtype),
        grid_spec=pltpu.PrefetchScalarGridSpec(
            num_scalar_prefetch=0,
            grid=(gj, gi),
            in_specs=[
                # Streaming activation tile (double-buffered by default).
                pl.BlockSpec((tm, k_pad), lambda j, i: (i, 0)),
                # Resident weight panel: constant across the inner M sweep,
                # so a single buffer suffices (saves VMEM for bigger TM).
                pl.BlockSpec((k_pad, tn), lambda j, i: (0, j),
                             pipeline_mode=pl.Buffered(1)),
                # Resident bias panel.
                pl.BlockSpec((1, tn), lambda j, i: (0, j),
                             pipeline_mode=pl.Buffered(1)),
            ],
            out_specs=pl.BlockSpec((tm, tn), lambda j, i: (i, j)),
        ),
        compiler_params=pltpu.CompilerParams(
            dimension_semantics=("parallel", "parallel"),
            vmem_limit_bytes=vmem_limit,
        ),
        cost_estimate=pl.CostEstimate(
            flops=flops, bytes_accessed=bytes_accessed, transcendentals=0),
    )(x2d, wT_pad, b_pad)

    if m_pad != m or n_pad != out_dim:
        out = out[:m, :out_dim]
    return out


class DensePoolerPallas:
    """JAX/Pallas re-implementation of DensePooler's forward pass."""

    def __init__(self, input_dim=768, output_dim=768, tied=True, key=None,
                 use_bf16_matmul=True):
        if key is None:
            key = jax.random.PRNGKey(0)
        kq_w, kq_b, kp_w, kp_b = jax.random.split(key, 4)
        bound = 1.0 / jnp.sqrt(jnp.float32(input_dim))
        # nn.Linear stores weight as (output_dim, input_dim); init U(-bound, bound).
        self.w_q = jax.random.uniform(
            kq_w, (output_dim, input_dim), jnp.float32, -bound, bound)
        self.b_q = jax.random.uniform(
            kq_b, (output_dim,), jnp.float32, -bound, bound)
        if tied:
            self.w_p, self.b_p = self.w_q, self.b_q
        else:
            self.w_p = jax.random.uniform(
                kp_w, (output_dim, input_dim), jnp.float32, -bound, bound)
            self.b_p = jax.random.uniform(
                kp_b, (output_dim,), jnp.float32, -bound, bound)

        self.input_dim = input_dim
        self.output_dim = output_dim
        self.use_bf16_matmul = use_bf16_matmul
        # 128-alignment is generation-neutral; default 768 is already 3*256,
        # fully filling v6e/v7x 256-wide MXU tiles.
        self._k_pad = _round_up(input_dim, 128)
        self._n_pad = _round_up(output_dim, 128)

        # Pre-transpose + pad the weights ONCE (never per forward call).
        w_dtype = jnp.bfloat16 if use_bf16_matmul else jnp.float32

        def prep_w(w):
            wT = jnp.pad(w.T, ((0, self._k_pad - input_dim),
                               (0, self._n_pad - output_dim)))
            return wT.astype(w_dtype)

        def prep_b(b):
            return jnp.pad(b, (0, self._n_pad - output_dim)).reshape(1, -1) \
                      .astype(jnp.float32)

        self.wT_q_pad, self.b_q_pad = prep_w(self.w_q), prep_b(self.b_q)
        if tied:
            self.wT_p_pad, self.b_p_pad = self.wT_q_pad, self.b_q_pad
        else:
            self.wT_p_pad, self.b_p_pad = prep_w(self.w_p), prep_b(self.b_p)

    def _apply(self, x, wT_pad, b_pad):
        lead = x.shape[:-1]
        x2d = x.reshape(-1, x.shape[-1])
        m, _ = x2d.shape

        tm, tn, vmem_limit = _choose_tiles(
            m, self._k_pad, self._n_pad,
            jnp.dtype(x2d.dtype).itemsize, jnp.dtype(wT_pad.dtype).itemsize)

        out = _linear_fwd(x2d, wT_pad, b_pad,
                          tm=tm, tn=tn, k_pad=self._k_pad, n_pad=self._n_pad,
                          out_dim=self.output_dim, vmem_limit=vmem_limit)
        return out.reshape(*lead, self.output_dim)

    def __call__(self, q=None, p=None, **kwargs):
        if q is not None:
            return self._apply(q, self.wT_q_pad, self.b_q_pad)
        elif p is not None:
            return self._apply(p, self.wT_p_pad, self.b_p_pad)
        else:
            raise ValueError


if __name__ == "__main__":
    key = jax.random.PRNGKey(0)
    k_params, k_q, k_p = jax.random.split(key, 3)

    batch, seq, hidden = 2, 8, 32
    q = jax.random.normal(k_q, (batch, seq, hidden), jnp.float32)
    p = jax.random.normal(k_p, (batch, seq, hidden), jnp.float32)

    # Default fast path: bf16 MXU operands, f32 accumulation, tied weights.
    pooler = DensePoolerPallas(input_dim=hidden, output_dim=hidden, tied=True,
                               key=k_params)
    out_q = pooler(q=q)
    out_p = pooler(p=p)
    jax.block_until_ready((out_q, out_p))

    ref_q = q @ pooler.w_q.T + pooler.b_q
    ref_p = p @ pooler.w_p.T + pooler.b_p
    assert out_q.shape == (batch, seq, hidden)
    assert out_p.shape == (batch, seq, hidden)
    # bf16 operand rounding -> looser tolerance for the fast path.
    assert jnp.allclose(out_q, ref_q, atol=3e-2, rtol=3e-2)
    assert jnp.allclose(out_p, ref_p, atol=3e-2, rtol=3e-2)

    # Exact-numerics path (f32 MXU operands, untied) matches nn.Linear tightly.
    pooler_f32 = DensePoolerPallas(input_dim=hidden, output_dim=hidden,
                                   tied=False, key=k_params,
                                   use_bf16_matmul=False)
    out_q32 = pooler_f32(q=q)
    out_p32 = pooler_f32(p=p)
    jax.block_until_ready((out_q32, out_p32))
    assert jnp.allclose(out_q32, q @ pooler_f32.w_q.T + pooler_f32.b_q,
                        atol=1e-5, rtol=1e-5)
    assert jnp.allclose(out_p32, p @ pooler_f32.w_p.T + pooler_f32.b_p,
                        atol=1e-5, rtol=1e-5)

    print("KERNEL_OK")
</pallas_src>

<mosaic_0001>
module attributes {stable_mosaic.version = 11 : i64} {
  func.func @_linear_kernel(%arg0: i32, %arg1: i32, %arg2: memref<8x128xf32, #tpu.memory_space<vmem>>, %arg3: memref<128x128xbf16, #tpu.memory_space<vmem>>, %arg4: memref<1x128xf32, #tpu.memory_space<vmem>>, %arg5: memref<8x128xf32, #tpu.memory_space<vmem>>) attributes {dimension_semantics = [#tpu.dimension_semantics<parallel>, #tpu.dimension_semantics<parallel>], iteration_bounds = array<i64: 1, 2>, scalar_prefetch = 0 : i64, scratch_operands = 0 : i64, tpu.core_type = #tpu.core_type<tc>, window_params = [{transform_indices = @transform_0, window_bounds = array<i64: 8, 128>}, {pipeline_mode = #tpu.pipeline_mode<synchronous>, transform_indices = @transform_1, window_bounds = array<i64: 128, 128>}, {pipeline_mode = #tpu.pipeline_mode<synchronous>, transform_indices = @transform_2, window_bounds = array<i64: 1, 128>}, {transform_indices = @transform_3, window_bounds = array<i64: 8, 128>}]} {
    %c0 = arith.constant 0 : index
    %c0_0 = arith.constant 0 : index
    %0 = vector.load %arg3[%c0, %c0_0] : memref<128x128xbf16, #tpu.memory_space<vmem>>, vector<128x128xbf16>
    %c0_1 = arith.constant 0 : index
    %c0_2 = arith.constant 0 : index
    %1 = vector.load %arg2[%c0_1, %c0_2] : memref<8x128xf32, #tpu.memory_space<vmem>>, vector<8x128xf32>
    %2 = arith.truncf %1 : vector<8x128xf32> to vector<8x128xbf16>
    %cst = arith.constant dense<0.000000e+00> : vector<8x128xf32>
    %3 = tpu.matmul %2, %0, %cst {dimension_numbers = #tpu.dot_dimension_numbers<[1], [0], [0], [1], [0, 0, 1, 1], [], []>} : vector<8x128xbf16>, vector<128x128xbf16>, vector<8x128xf32> -> vector<8x128xf32>
    %c0_3 = arith.constant 0 : index
    %c0_4 = arith.constant 0 : index
    %4 = vector.load %arg4[%c0_3, %c0_4] : memref<1x128xf32, #tpu.memory_space<vmem>>, vector<1x128xf32>
    %5 = vector.broadcast %4 : vector<1x128xf32> to vector<8x128xf32>
    %6 = arith.addf %3, %5 : vector<8x128xf32>
    %c0_5 = arith.constant 0 : index
    %c0_6 = arith.constant 0 : index
    %7 = vector.load %arg5[%c0_5, %c0_6] : memref<8x128xf32, #tpu.memory_space<vmem>>, vector<8x128xf32>
    tpu.vector_store %arg5[%c0_5, %c0_6], %6 {strides = array<i32>} : memref<8x128xf32, #tpu.memory_space<vmem>>, vector<8x128xf32>,
    return
  }
  func.func @transform_0(%arg0: i32, %arg1: i32) -> (i32, i32) {
    %c0_i32 = arith.constant 0 : i32
    %c0_i32_0 = arith.constant 0 : i32
    return %arg1, %c0_i32 : i32, i32
  }
  func.func @transform_1(%arg0: i32, %arg1: i32) -> (i32, i32) {
    %c0_i32 = arith.constant 0 : i32
    %c0_i32_0 = arith.constant 0 : i32
    return %c0_i32, %arg0 : i32, i32
  }
  func.func @transform_2(%arg0: i32, %arg1: i32) -> (i32, i32) {
    %c0_i32 = arith.constant 0 : i32
    %c0_i32_0 = arith.constant 0 : i32
    return %c0_i32, %arg0 : i32, i32
  }
  func.func @transform_3(%arg0: i32, %arg1: i32) -> (i32, i32) {
    %c0_i32 = arith.constant 0 : i32
    return %arg1, %arg0 : i32, i32
  }
}

</mosaic_0001>

<llo_original>
// kernel: _linear_fwd.1
$region0: #{_linear_fwd.1}
  #allocation0 [shape = 'u32[]', space=smem, size = 0x4, offset = 0x4, fixed_abs, tag = 'smem constant byte address 0x4 - core index']
  #allocation1 [shape = 'u32[144,128]{1,0:T(1,128)}', space=vmem, size = 0x12000, scoped, tag = 'internal scratch']
  %s0 = inlined_call_operand.vmem [shape: f32[16,128], index: 0, kind: input, shape index: {}]
  %s1 = inlined_call_operand.hbm [shape: bf16[128,128], index: 1, kind: input, shape index: {}]
  %s2 = inlined_call_operand.vmem [shape: f32[1,128], index: 2, kind: input, shape index: {}]
  %s3 = inlined_call_operand.hbm [shape: f32[16,128], index: 3, kind: output, shape index: {}]
  %s4 = sld [smem:[#allocation0]]
  $region49: #{_linear_fwd.1} parent=0
    _
  %s6 = ssub.s32 1, %s4
  %s7 = scalar_select 0, %s6, %s4
  $region1: #{_linear_fwd.1} parent=0
    #allocation2 [shape = 'u8[32768]{0}', space=vmem, size = 0x8000, scoped, tag = 'input window, operand 1, single buffered']
    #allocation3 [shape = 's32[2]{0}', space=sflag, size = 0x8, scoped, tag = 'scoped memory for _linear_fwd.1']
    #allocation4 [shape = 's32[2]{0}', space=sflag, size = 0x8, scoped, tag = 'scoped memory for _linear_fwd.1']
    #allocation5 [shape = 'u8[8192]{0}', space=vmem, size = 0x2000, scoped, tag = 'output window, operand 0']
    %8 = vsyncpa [#allocation3], 0
    %9 = vsyncpa [#allocation4], 0
    %s10 = scalar_lea.sflag [#allocation4], 1
    %11 = vsyncpa %s10, 0
    loop: start=0, step=1, limit=4
    $region2: #{_linear_fwd.1} parent=1 // loop_pre_header
      _
    $region3: #{_linear_fwd.1} parent=1 // loop_header
      %s13 = sphi 0, %s17
      %p14 = scmp.ge.s32.totalorder %s13, 4
      %s20 = sphi 0, %s32
      %s21 = sphi 0, %s28
      %s22 = sphi 0, %s20
      %s23 = sphi 0, %s21
      %s24 = sphi 0, %s22
      %s25 = sphi 0, %s23
      %s35 = sphi 0, %s37
      %s38 = sphi 0, %s35
      %s39 = sphi 0, %s38
      %s55 = sphi 0, %s39
      %s61 = sphi 0, %s63
      %s64 = sphi 0, %s61
      %s65 = sphi 0, %s64
      %s81 = sphi 0, %s65
      %s87 = sphi 0, %s89
      %s90 = sphi 0, %s87
      %s91 = sphi 0, %s90
      %s107 = sphi 0, %s91
      %s115 = sphi 0, %s117
      %s118 = sphi 0, %s115
      %s119 = sphi 0, %s118
      %s135 = sphi 0, %s119
    $region4: #{_linear_fwd.1} parent=1 // loop_header_branch
      %16 = sbr.rel (%p14) target = $region8
    $region5: #{_linear_fwd.1} parent=1 // loop_body
      %s18 = ssub.s32 %s13, 1
      %s19 = ssub.s32 %s13, 2
      %s26 = sadd.s32 1, %s21
      %p27 = scmp.ge.s32.totalorder %s26, 2
      %s28 = scalar_select %p27, 0, %s26
      %s29 = sadd.s32 1, %s20
      %s30 = scalar_select %p27, %s29, %s20
      %p31 = scmp.ge.s32.totalorder %s30, 1
      %s32 = scalar_select %p31, 0, %s30
      %s33 = ssub.s32 %s21, %s28
      %p34 = scmp.eq.s32.totalorder %s33, 0
      %s36 = sadd.s32 %s35, 1
      %s37 = scalar_select %p34, %s35, %s36
      %p40 = pneg %p34
      %p41 = scmp.eq.s32.totalorder %s13, 1
      %p42 = por %p40, %p41
      %p43 = scmp.ne.s32.totalorder %s35, %s38
      %p44 = scmp.eq.s32.totalorder %s13, 0
      %p45 = por %p43, %p44
      %p46 = scmp.ne.s32.totalorder %s35, %s38
      %p47 = scmp.eq.s32.totalorder %s18, 1
      %p48 = por %p46, %p47
      %p49 = scmp.ne.s32.totalorder %s38, %s39
      %p50 = scmp.eq.s32.totalorder %s18, 0
      %p51 = por %p49, %p50
      %p52 = scmp.ne.s32.totalorder %s38, %s39
      %p53 = scmp.eq.s32.totalorder %s19, 1
      %p54 = por %p52, %p53
      %p56 = scmp.ne.s32.totalorder %s39, %s55
      %p57 = scmp.eq.s32.totalorder %s19, 0
      %p58 = por %p56, %p57
      %s59 = ssub.s32 %s20, %s32
      %p60 = scmp.eq.s32.totalorder %s59, 0
      %s62 = sadd.s32 %s61, 1
      %s63 = scalar_select %p60, %s61, %s62
      %p66 = pneg %p60
      %p67 = scmp.eq.s32.totalorder %s13, 1
      %p68 = por %p66, %p67
      %p69 = scmp.ne.s32.totalorder %s61, %s64
      %p70 = scmp.eq.s32.totalorder %s13, 0
      %p71 = por %p69, %p70
      %p72 = scmp.ne.s32.totalorder %s61, %s64
      %p73 = scmp.eq.s32.totalorder %s18, 1
      %p74 = por %p72, %p73
      %p75 = scmp.ne.s32.totalorder %s64, %s65
      %p76 = scmp.eq.s32.totalorder %s18, 0
      %p77 = por %p75, %p76
      %p78 = scmp.ne.s32.totalorder %s64, %s65
      %p79 = scmp.eq.s32.totalorder %s19, 1
      %p80 = por %p78, %p79
      %p82 = scmp.ne.s32.totalorder %s65, %s81
      %p83 = scmp.eq.s32.totalorder %s19, 0
      %p84 = por %p82, %p83
      %s85 = ssub.s32 %s20, %s32
      %p86 = scmp.eq.s32.totalorder %s85, 0
      %s88 = sadd.s32 %s87, 1
      %s89 = scalar_select %p86, %s87, %s88
      %p92 = pneg %p86
      %p93 = scmp.eq.s32.totalorder %s13, 1
      %p94 = por %p92, %p93
      %p95 = scmp.ne.s32.totalorder %s87, %s90
      %p96 = scmp.eq.s32.totalorder %s13, 0
      %p97 = por %p95, %p96
      %p98 = scmp.ne.s32.totalorder %s87, %s90
      %p99 = scmp.eq.s32.totalorder %s18, 1
      %p100 = por %p98, %p99
      %p101 = scmp.ne.s32.totalorder %s90, %s91
      %p102 = scmp.eq.s32.totalorder %s18, 0
      %p103 = por %p101, %p102
      %p104 = scmp.ne.s32.totalorder %s90, %s91
      %p105 = scmp.eq.s32.totalorder %s19, 1
      %p106 = por %p104, %p105
      %p108 = scmp.ne.s32.totalorder %s91, %s107
      %p109 = scmp.eq.s32.totalorder %s19, 0
      %p110 = por %p108, %p109
      %s111 = ssub.s32 %s21, %s28
      %s112 = ssub.s32 %s20, %s32
      %s113 = sor.u32 %s111, %s112
      %p114 = scmp.eq.s32.totalorder %s113, 0
      %s116 = sadd.s32 %s115, 1
      %s117 = scalar_select %p114, %s115, %s116
      %p120 = pneg %p114
      %p121 = scmp.eq.s32.totalorder %s13, 1
      %p122 = por %p120, %p121
      %p123 = scmp.ne.s32.totalorder %s115, %s118
      %p124 = scmp.eq.s32.totalorder %s13, 0
      %p125 = por %p123, %p124
      %p126 = scmp.ne.s32.totalorder %s115, %s118
      %p127 = scmp.eq.s32.totalorder %s18, 1
      %p128 = por %p126, %p127
      %p129 = scmp.ne.s32.totalorder %s118, %s119
      %p130 = scmp.eq.s32.totalorder %s18, 0
      %p131 = por %p129, %p130
      %p132 = scmp.ne.s32.totalorder %s118, %s119
      %p133 = scmp.eq.s32.totalorder %s19, 1
      %p134 = por %p132, %p133
      %p136 = scmp.ne.s32.totalorder %s119, %s135
      %p137 = scmp.eq.s32.totalorder %s19, 0
      %p138 = por %p136, %p137
      %p139 = scmp.le.s32.totalorder 1, %s13
      %p140 = scmp.lt.s32.totalorder %s13, 3
      %p141 = pnand %p139, %p140
      %p142 = pneg %p141
      // Predicated region
      $region9: #{_linear_fwd.1} parent=5 // pred_check
        _
      $region10: #{_linear_fwd.1} parent=5 // pred_check_branch
        %144 = sbr.rel (%p141) target = $region12
      $region11: #{_linear_fwd.1} parent=5 // pred_region
        %s145 = ssub.s32 %s13, 1
        // Predicated region
        $region13: #{_linear_fwd.1} parent=11 // pred_check
          %p146 = pneg %p77
        $region14: #{_linear_fwd.1} parent=11 // pred_check_branch
          %148 = sbr.rel (%p146) target = $region16
        $region15: #{_linear_fwd.1} parent=11 // pred_region
          %s150 = ssub.s32 1024, 1024
          %151 = vsyncadd [#allocation3], %s150
          %s152 = smul.addr %s22, 64
          %s153 = scalar_lea.hbm %s1, %s152
          %s154 = sshll.u32 [#allocation2], 4
          %s155 = int_to_ptr.vmem [resolvable:$true] %s154
          %160 = dma.hbm_to_vmem [thread:$0]  %s153, 1024, %s155, [#allocation3], 64, 64, 4
        $region16: #{_linear_fwd.1} parent=11 // pred_fallthru
          _
        // Predicated region
        $region17: #{_linear_fwd.1} parent=11 // pred_check
          %p161 = pneg %p103
        $region18: #{_linear_fwd.1} parent=11 // pred_check_branch
          %163 = sbr.rel (%p161) target = $region20
        $region19: #{_linear_fwd.1} parent=11 // pred_region
          %p164 = scmp.lt.s32.totalorder %s22, 0
          %s165 = scalar_select %p164, %s22, 0
          %s166 = scalar_lea.vmem %s2, %s165
        $region20: #{_linear_fwd.1} parent=11 // pred_fallthru
          _
      $region12: #{_linear_fwd.1} parent=5 // pred_fallthru
        _
      %p167 = scmp.lt.s32.totalorder %s13, 2
      // Predicated region
      $region21: #{_linear_fwd.1} parent=5 // pred_check
        %p168 = pneg %p167
      $region22: #{_linear_fwd.1} parent=5 // pred_check_branch
        %170 = sbr.rel (%p168) target = $region24
      $region23: #{_linear_fwd.1} parent=5 // pred_region
        // Predicated region
        $region25: #{_linear_fwd.1} parent=23 // pred_check
          %p171 = pneg %p45
        $region26: #{_linear_fwd.1} parent=23 // pred_check_branch
          %173 = sbr.rel (%p171) target = $region28
        $region27: #{_linear_fwd.1} parent=23 // pred_region
          %p174 = scmp.lt.s32.totalorder %s21, 1
          %s175 = scalar_select %p174, %s21, 1
          %s176 = smul.addr %s175, 8
          %s177 = scalar_lea.vmem %s0, %s176
        $region28: #{_linear_fwd.1} parent=23 // pred_fallthru
          _
      $region24: #{_linear_fwd.1} parent=5 // pred_fallthru
        _
      %p178 = scmp.le.s32.totalorder 1, %s13
      %p179 = scmp.lt.s32.totalorder %s13, 3
      %p180 = pnand %p178, %p179
      %p181 = pneg %p180
      // Predicated region
      $region29: #{_linear_fwd.1} parent=5 // pred_check
        _
      $region30: #{_linear_fwd.1} parent=5 // pred_check_branch
        %183 = sbr.rel (%p180) target = $region32
      $region31: #{_linear_fwd.1} parent=5 // pred_region
        %s184 = ssub.s32 %s13, 1
        // Predicated region
        $region33: #{_linear_fwd.1} parent=31 // pred_check
          %p185 = pneg %p77
        $region34: #{_linear_fwd.1} parent=31 // pred_check_branch
          %187 = sbr.rel (%p185) target = $region36
        $region35: #{_linear_fwd.1} parent=31 // pred_region
          %188 = dma.done [#allocation3], 1024
        $region36: #{_linear_fwd.1} parent=31 // pred_fallthru
          _
        %p189 = scmp.lt.s32.totalorder %s23, 1
        %s190 = scalar_select %p189, %s23, 1
        %s191 = smul.addr %s190, 8
        %s192 = scalar_lea.vmem %s0, %s191
        %p193 = pneg %p51
        %p194 = pneg %p48
        %p195 = pneg %p77
        %p196 = pneg %p74
        %p197 = scmp.lt.s32.totalorder %s22, 0
        %s198 = scalar_select %p197, %s22, 0
        %s199 = scalar_lea.vmem %s2, %s198
        %p200 = pneg %p103
        %p201 = pneg %p100
        %p202 = pneg %p131
        %p203 = pneg %p128
        %s204 = sand.u32 %s118, 1
        %s205 = scalar_lea.sflag [#allocation4], %s204
        %s206 = sand.u32 %s118, 1
        %s207 = smul.addr %s206, 8
        %s208 = scalar_lea.vmem [#allocation5], %s207
        %p209 = scmp.lt.s32.totalorder %s23, 1
        %s210 = scalar_select %p209, %s23, 1
        %s211 = smul.addr %s210, 8
        %s212 = scalar_lea.vmem %s0, %s211
        %p213 = scmp.lt.s32.totalorder %s22, 0
        %s214 = scalar_select %p213, %s22, 0
        %s215 = scalar_lea.vmem %s2, %s214
        %v217 = vld [vmem:[#allocation2] sm:$0xf]
        %v218 = vld [vmem:[#allocation2 + $0x4] sm:$0xf]
        %v219 = vld [vmem:[#allocation2 + $0x8] sm:$0xf]
        %v220 = vld [vmem:[#allocation2 + $0xc] sm:$0xf]
        %v221 = vld [vmem:[#allocation2 + $0x10] sm:$0xf]
        %v222 = vld [vmem:[#allocation2 + $0x14] sm:$0xf]
        %v223 = vld [vmem:[#allocation2 + $0x18] sm:$0xf]
        %v224 = vld [vmem:[#allocation2 + $0x1c] sm:$0xf]
        %v225 = vld [vmem:[#allocation2 + $0x20] sm:$0xf]
        %v226 = vld [vmem:[#allocation2 + $0x24] sm:$0xf]
        %v227 = vld [vmem:[#allocation2 + $0x28] sm:$0xf]
        %v228 = vld [vmem:[#allocation2 + $0x2c] sm:$0xf]
        %v229 = vld [vmem:[#allocation2 + $0x30] sm:$0xf]
        %v230 = vld [vmem:[#allocation2 + $0x34] sm:$0xf]
        %v231 = vld [vmem:[#allocation2 + $0x38] sm:$0xf]
        %v232 = vld [vmem:[#allocation2 + $0x3c] sm:$0xf]
        %v233 = vld [vmem:[%s212] sm:$0xff]
        %v234 = vpack.c.bf16 %v233, %v233
        %v235 = vld [vmem:[%s215] sm:$0x1]
        %v237 = vlaneseq
        %v238 = vshrl.u32 %v237, 7
        %v239 = vsub.s32 0, %v238
        %v240 = vrot.slane %v235, %v239
        %v258 = vunpack.c.l.b16 %v217
        %v259 = vunpack.c.l.b16 %v218
        %v260 = vunpack.c.l.b16 %v219
        %v261 = vunpack.c.l.b16 %v220
        %v262 = vunpack.c.l.b16 %v221
        %v263 = vunpack.c.l.b16 %v222
        %v264 = vunpack.c.l.b16 %v223
        %v265 = vunpack.c.l.b16 %v224
        %v266 = vunpack.c.l.b16 %v225
        %v267 = vunpack.c.l.b16 %v226
        %v268 = vunpack.c.l.b16 %v227
        %v269 = vunpack.c.l.b16 %v228
        %v270 = vunpack.c.l.b16 %v229
        %v271 = vunpack.c.l.b16 %v230
        %v272 = vunpack.c.l.b16 %v231
        %v273 = vunpack.c.l.b16 %v232
        %v274 = vpack.c.b16 %v259, %v258
        %v275 = vpack.c.b16 %v261, %v260
        %v276 = vpack.c.b16 %v263, %v262
        %v277 = vpack.c.b16 %v265, %v264
        %v278 = vpack.c.b16 %v267, %v266
        %v279 = vpack.c.b16 %v269, %v268
        %v280 = vpack.c.b16 %v271, %v270
        %v281 = vpack.c.b16 %v273, %v272
        %290 = vmatprep.subr.bf16.mxu0 0
        %291 = vmatpush1.bf16.msra.mxu0 %v274
        %292 = vmatprep.subr.bf16.mxu0 0
        %293 = vmatpush1.bf16.msra.mxu0 %v275
        %294 = vmatprep.subr.bf16.mxu0 0
        %295 = vmatpush1.bf16.msra.mxu0 %v276
        %296 = vmatprep.subr.bf16.mxu0 0
        %297 = vmatpush1.bf16.msra.mxu0 %v277
        %298 = vmatprep.subr.bf16.mxu0 0
        %299 = vmatpush1.bf16.msra.mxu0 %v278
        %300 = vmatprep.subr.bf16.mxu0 0
        %301 = vmatpush1.bf16.msra.mxu0 %v279
        %302 = vmatprep.subr.bf16.mxu0 0
        %303 = vmatpush1.bf16.msra.mxu0 %v280
        %304 = vmatprep.subr.bf16.mxu0 0
        %305 = vmatpush1.bf16.msra.mxu0 %v281
        %306 = vmatprep.subr.bf16.mxu0 0
        %307 = vmatpush1.bf16.msra.mxu0 0
        %308 = vmatprep.subr.bf16.mxu0 0
        %309 = vmatpush1.bf16.msra.mxu0 0
        %310 = vmatprep.subr.bf16.mxu0 0
        %311 = vmatpush1.bf16.msra.mxu0 0
        %312 = vmatprep.subr.bf16.mxu0 0
        %313 = vmatpush1.bf16.msra.mxu0 0
        %314 = vmatprep.subr.bf16.mxu0 0
        %315 = vmatpush1.bf16.msra.mxu0 0
        %316 = vmatprep.subr.bf16.mxu0 0
        %317 = vmatpush1.bf16.msra.mxu0 0
        %318 = vmatprep.subr.bf16.mxu0 0
        %319 = vmatpush1.bf16.msra.mxu0 0
        %320 = vmatprep.subr.bf16.mxu0 0
        %321 = vmatpush1.bf16.msra.mxu0 0
        %322 = vmatprep.mubr.bf16.mxu0 0
        %323 = vmatmul.mubr.bf16.gmra.mrb[0].mxu0 %v234
        %v324 = vpop.f32.mrb[0].mxu0
        %v325 = vadd.f32 %v240, %v324
        %v326 = vpop.f32.mrb[0].mxu0
        %v327 = vpop.f32.mrb[0].mxu0
        %v328 = vpop.f32.mrb[0].mxu0
        %329 = vdwg.mxu0
        %330 = vst [vmem:[%s208] sm:$0xff] %v325
        %s331 = sand.u32 %s118, 1
        %s332 = scalar_lea.sflag [#allocation4], %s331
        %s333 = sand.u32 %s118, 1
        %s334 = smul.addr %s333, 8
        %s335 = scalar_lea.vmem [#allocation5], %s334
        // Predicated region
        $region37: #{_linear_fwd.1} parent=31 // pred_check
          %p336 = pneg %p128
        $region38: #{_linear_fwd.1} parent=31 // pred_check_branch
          %338 = sbr.rel (%p336) target = $region40
        $region39: #{_linear_fwd.1} parent=31 // pred_region
          %s340 = ssub.s32 128, 128
          %341 = vsyncadd %s332, %s340
          %s342 = sadd.s32 %s22, %s23
          %s343 = smul.addr %s342, 128
          %s344 = scalar_lea.hbm %s3, %s343
          %s346 = sshll.u32 %s335, 4
          %s347 = int_to_ptr.vmem [resolvable:$true] %s346
          %349 = dma.vmem_to_hbm [thread:$0]  %s347, 128, %s344, %s332
        $region40: #{_linear_fwd.1} parent=31 // pred_fallthru
          _
      $region32: #{_linear_fwd.1} parent=5 // pred_fallthru
        _
      %p350 = scmp.le.s32.totalorder 2, %s13
      // Predicated region
      $region41: #{_linear_fwd.1} parent=5 // pred_check
        %p351 = pneg %p350
      $region42: #{_linear_fwd.1} parent=5 // pred_check_branch
        %353 = sbr.rel (%p351) target = $region44
      $region43: #{_linear_fwd.1} parent=5 // pred_region
        %s354 = ssub.s32 %s13, 2
        // Predicated region
        $region45: #{_linear_fwd.1} parent=43 // pred_check
          %p355 = pneg %p134
        $region46: #{_linear_fwd.1} parent=43 // pred_check_branch
          %357 = sbr.rel (%p355) target = $region48
        $region47: #{_linear_fwd.1} parent=43 // pred_region
          %s358 = sand.u32 %s119, 1
          %s359 = scalar_lea.sflag [#allocation4], %s358
          %s360 = sand.u32 %s119, 1
          %s361 = smul.addr %s360, 8
          %s362 = scalar_lea.vmem [#allocation5], %s361
          %363 = dma.done %s359, 128
        $region48: #{_linear_fwd.1} parent=43 // pred_fallthru
          _
      $region44: #{_linear_fwd.1} parent=5 // pred_fallthru
        _
    $region6: #{_linear_fwd.1} parent=1 // loop_footer
      %s17 = sadd.s32 1, %s13
    $region7: #{_linear_fwd.1} parent=1 // loop_footer_branch
      %12 = sbr.rel target = $region3
    $region8: #{_linear_fwd.1} parent=1 // loop_exit
      _
    %364 = vsyncpa [#allocation3], 1
    %s365 = scalar_lea.sflag [#allocation3], 1
    %366 = vsyncpa %s365, 1
    %367 = vsyncpa [#allocation4], 1
    %s368 = scalar_lea.sflag [#allocation4], 1
    %369 = vsyncpa %s368, 1

</llo_original>
